<compile_context>
chip_gen: v5e
topology: v5e:2x2
jax: 0.10.0
libtpu: 0.0.40
codegen_flags: <defaults>
</compile_context>

<pallas_src>
import jax
import jax.numpy as jnp
from jax.experimental import pallas as pl
from jax.experimental.pallas import tpu as pltpu


def _make_kernel(BN, L, Lout, Cin, Cp, stride, has_shortcut, cdtype):
    f32 = jnp.float32

    def tap_s(ref, k):                      # conv1 taps (stride = `stride`)
        if stride == 1:
            return ref[:, k:k + Lout, :]
        return ref[:, pl.ds(k, Lout, stride=stride), :]

    def tap_1(ref, k):                      # conv2 taps (stride = 1)
        return ref[:, k:k + Lout, :]

    def conv3(src_ref, w_ref, C, tap):
        # Three per-tap matmuls accumulated in one f32 accumulator — no im2col
        # materialization of a (BN*Lout, 3*C) buffer.
        acc = jnp.dot(tap(src_ref, 0).reshape(BN * Lout, C), w_ref[0],
                      preferred_element_type=f32)
        for k in (1, 2):
            acc += jnp.dot(tap(src_ref, k).reshape(BN * Lout, C), w_ref[k],
                           preferred_element_type=f32)
        return acc

    def body(x_ref, w1_ref, w2_ref, wsc_ref, b_ref, out_ref, xp_ref, h1p_ref):
        # ---- halo-pad x into a zero-bordered VMEM scratch (replaces wrapper
        # jnp.pad).  Borders re-zeroed every step: each core has its own
        # scratch under "parallel" sharding and may never run step 0.
        xp_ref[:, 0:1, :] = jnp.zeros((BN, 1, Cin), cdtype)
        xp_ref[:, L + 1:L + 2, :] = jnp.zeros((BN, 1, Cin), cdtype)
        xp_ref[:, 1:L + 1, :] = x_ref[...]

        # ---- conv1 (+ folded bn1) + relu ----
        h1 = jnp.maximum(conv3(xp_ref, w1_ref, Cin, tap_s) + b_ref[0:1, :], 0.0)

        # ---- conv2 (+ folded bn2): 1-row halo via zero-bordered scratch ----
        h1p_ref[:, 0:1, :] = jnp.zeros((BN, 1, Cp), cdtype)
        h1p_ref[:, Lout + 1:Lout + 2, :] = jnp.zeros((BN, 1, Cp), cdtype)
        h1p_ref[:, 1:Lout + 1, :] = h1.reshape(BN, Lout, Cp).astype(cdtype)
        h2 = conv3(h1p_ref, w2_ref, Cp, tap_1) + b_ref[1:2, :]

        # ---- shortcut (specialized at trace time) ----
        if has_shortcut:                     # 1x1 conv, stride s, folded bn
            xs = tap_s(xp_ref, 1).reshape(BN * Lout, Cin)
            sc = jnp.dot(xs, wsc_ref[...],
                         preferred_element_type=f32) + b_ref[2:3, :]
        else:                                # identity (f32 upcast for the add)
            sc = x_ref[...].reshape(BN * L, Cin).astype(f32)

        out_ref[...] = jnp.maximum(h2 + sc, 0.0)

    if has_shortcut:
        def kernel(x_ref, w1_ref, w2_ref, wsc_ref, b_ref, out_ref, xp_ref, h1p_ref):
            body(x_ref, w1_ref, w2_ref, wsc_ref, b_ref, out_ref, xp_ref, h1p_ref)
    else:
        def kernel(x_ref, w1_ref, w2_ref, b_ref, out_ref, xp_ref, h1p_ref):
            body(x_ref, w1_ref, w2_ref, None, b_ref, out_ref, xp_ref, h1p_ref)
    return kernel


def _vmem_bytes(bn, L, Lout, Cin, Cp, isz):
    x_in = 2 * bn * L * Cin * isz                 # double-buffered input block
    out = 2 * bn * Lout * Cp * 4                  # double-buffered f32 output
    scr = bn * (L + 2) * Cin * isz + bn * (Lout + 2) * Cp * isz
    wts = 2 * (3 * Cin * Cp + 3 * Cp * Cp + Cin * Cp) * isz + 2 * 3 * Cp * 4
    return x_in + out + scr + wts


def _pick_batch_tile(N, L, Lout, Cin, Cp, isz,
                     target_m=1024, tile_budget=24 << 20):
    """Batch tile so M = bn*Lout reaches ~target_m (fills the MXU, amortizes
    per-step overhead) while the per-step VMEM stays inside a budget that is
    safe even on v7x (64 MiB physical).  bn*Lout must stay a multiple of 8
    (output-block (8,128) rule) unless bn == N."""
    cands = []
    for bn in range(1, N + 1):
        if N % bn:
            continue
        if bn != N and (bn * Lout) % 8 != 0:
            continue
        if _vmem_bytes(bn, L, Lout, Cin, Cp, isz) > tile_budget:
            continue
        cands.append(bn)
    if not cands:                                 # smallest legal tile
        for bn in range(1, N + 1):
            if N % bn == 0 and (bn == N or (bn * Lout) % 8 == 0):
                return bn
        return N
    reach = [bn for bn in cands if bn * Lout >= target_m]
    if reach:
        # Smallest tile that reaches the target M => most grid steps
        # (>= 2 per TensorCore on v7x whenever N allows it).
        return reach[0]
    return cands[-1]


def _full_spec(shape):
    nd = len(shape)
    return pl.BlockSpec(shape, lambda n: (0,) * nd)


def basic_block_forward(x, params, stride, compute_dtype=jnp.float32):
    """BasicBlock.forward.  x: (N, Cin, L) float32 (NCL, like PyTorch).

    Returns (N, planes, Lout) float32.  compute_dtype selects the matmul
    operand / activation-DMA dtype (jnp.bfloat16 recommended on v5e/v6e/v7x
    MXUs); accumulation, BN shifts, residual add and ReLU stay float32.
    """
    N, Cin, L = x.shape
    Cp = params['w1'].shape[0]
    Lout = (L - 1) // stride + 1
    has_shortcut = 'wsc' in params
    if not has_shortcut and (stride != 1 or Cin != Cp):
        raise ValueError("identity shortcut requires stride == 1 and in_planes == planes")

    cdtype = jnp.dtype(compute_dtype)
    isz = cdtype.itemsize

    # TODO(synk): a whole-network channels-last (NLC) pipeline would keep
    # activations as (N, L, C) between blocks and remove this transpose and
    # the final one; kept because the single-module contract is PyTorch NCL.
    xt = jnp.transpose(x, (0, 2, 1)).astype(cdtype)              # (N, L, Cin)

    def fold_bn(g, b, m, v, eps=1e-5):
        # TODO(synk): eval-mode BatchNorm (running stats); PyTorch's default
        # train-mode batch statistics are not reproduced.
        s = g / jnp.sqrt(v + eps)
        return s.astype(jnp.float32), (b - m * s).astype(jnp.float32)

    s1, b1 = fold_bn(*params['bn1'])
    s2, b2 = fold_bn(*params['bn2'])

    # BN scales folded into the conv weights; per-tap layout (3, C, Cp):
    # slab k, entry [ci, co] multiplies tap k, input channel ci -> output co.
    w1f = (jnp.transpose(params['w1'], (2, 1, 0)) * s1[None, None, :]).astype(cdtype)
    w2f = (jnp.transpose(params['w2'], (2, 1, 0)) * s2[None, None, :]).astype(cdtype)

    if has_shortcut:
        ssc, bsc = fold_bn(*params['bnsc'])
        wscf = (jnp.transpose(params['wsc'][:, :, 0], (1, 0)) * ssc[None, :]).astype(cdtype)
    else:
        bsc = jnp.zeros((Cp,), jnp.float32)
    bias = jnp.stack([b1, b2, bsc], axis=0)                      # (3, Cp) f32

    BN = _pick_batch_tile(N, L, Lout, Cin, Cp, isz)
    kernel = _make_kernel(BN, L, Lout, Cin, Cp, stride, has_shortcut, cdtype)

    in_specs = [pl.BlockSpec((BN, L, Cin), lambda n: (n, 0, 0)),   # x (un-padded)
                _full_spec((3, Cin, Cp)),                          # conv1 per-tap (BN-folded)
                _full_spec((3, Cp, Cp))]                           # conv2 per-tap (BN-folded)
    operands = [xt, w1f, w2f]
    if has_shortcut:
        in_specs.append(_full_spec((Cin, Cp)))                     # shortcut 1x1
        operands.append(wscf)
    in_specs.append(_full_spec((3, Cp)))                           # packed BN shifts
    operands.append(bias)

    est = _vmem_bytes(BN, L, Lout, Cin, Cp, isz)
    vmem_limit = int(min(max(32 << 20, 2 * est), 48 << 20))        # valid on v5e/v6e/v7x

    # NOTE: with real ResNet widths (C >= 128) the output is lane-dense; only
    # the narrow-C demo (Cp=8) takes masked partial stores.
    out = pl.pallas_call(
        kernel,
        grid=(N // BN,),
        in_specs=in_specs,
        out_specs=pl.BlockSpec((BN * Lout, Cp), lambda n: (n, 0)),
        out_shape=jax.ShapeDtypeStruct((N * Lout, Cp), jnp.float32),
        scratch_shapes=[pltpu.VMEM((BN, L + 2, Cin), cdtype),      # halo-padded x
                        pltpu.VMEM((BN, Lout + 2, Cp), cdtype)],   # halo-padded h1
        compiler_params=pltpu.CompilerParams(
            dimension_semantics=("parallel",),
            vmem_limit_bytes=vmem_limit),
    )(*operands)

    # TODO(synk): add an L-tile grid axis with a 2-row halo for very large L so
    # per-step buffers stay bounded on v7x's 64 MiB VMEM.
    return jnp.transpose(out.reshape(N, Lout, Cp), (0, 2, 1))      # (N, Cp, Lout)


def init_params(key, in_planes, planes, stride):
    ks = jax.random.split(key, 6)

    def bn_params(k, c):
        k1, k2, k3, k4 = jax.random.split(k, 4)
        gamma = jax.random.uniform(k1, (c,), jnp.float32, 0.5, 1.5)
        beta = jax.random.normal(k2, (c,), jnp.float32) * 0.1
        mean = jax.random.normal(k3, (c,), jnp.float32) * 0.1
        var = jax.random.uniform(k4, (c,), jnp.float32, 0.5, 1.5)
        return (gamma, beta, mean, var)

    p = {
        'w1': jax.random.normal(ks[0], (planes, in_planes, 3), jnp.float32) * 0.3,
        'bn1': bn_params(ks[1], planes),
        'w2': jax.random.normal(ks[2], (planes, planes, 3), jnp.float32) * 0.3,
        'bn2': bn_params(ks[3], planes),
    }
    if stride != 1 or in_planes != planes:
        p['wsc'] = jax.random.normal(ks[4], (planes, in_planes, 1), jnp.float32) * 0.3
        p['bnsc'] = bn_params(ks[5], planes)
    return p


def ref_forward(x, params, stride):
    """Pure-JAX reference of BasicBlock.forward (eval-mode BN)."""
    def bn(y, g, b, m, v, eps=1e-5):
        s = g / jnp.sqrt(v + eps)
        return (y - m[None, :, None]) * s[None, :, None] + b[None, :, None]

    def conv(y, w, s, pad):
        return jax.lax.conv_general_dilated(
            y, w, window_strides=(s,), padding=[(pad, pad)],
            dimension_numbers=('NCH', 'OIH', 'NCH'))

    out = jax.nn.relu(bn(conv(x, params['w1'], stride, 1), *params['bn1']))
    out = bn(conv(out, params['w2'], 1, 1), *params['bn2'])
    if 'wsc' in params:
        sc = bn(conv(x, params['wsc'], stride, 0), *params['bnsc'])
    else:
        sc = x
    return jax.nn.relu(out + sc)


if __name__ == "__main__":
    key = jax.random.PRNGKey(0)
    kx1, kx2, kp1, kp2 = jax.random.split(key, 4)

    # Case 1: downsampling block (stride=2, channel expansion -> conv shortcut)
    x1 = jax.random.normal(kx1, (2, 4, 16), jnp.float32)
    p1 = init_params(kp1, in_planes=4, planes=8, stride=2)
    y1 = jax.block_until_ready(basic_block_forward(x1, p1, stride=2))
    r1 = ref_forward(x1, p1, stride=2)
    assert y1.shape == (2, 8, 8), y1.shape
    assert jnp.allclose(y1, r1, atol=1e-4, rtol=1e-4), "stride-2 block mismatch"

    # Case 2: identity-shortcut block (stride=1, same channels)
    x2 = jax.random.normal(kx2, (2, 8, 16), jnp.float32)
    p2 = init_params(kp2, in_planes=8, planes=8, stride=1)
    y2 = jax.block_until_ready(basic_block_forward(x2, p2, stride=1))
    r2 = ref_forward(x2, p2, stride=1)
    assert y2.shape == (2, 8, 16), y2.shape
    assert jnp.allclose(y2, r2, atol=1e-4, rtol=1e-4), "stride-1 block mismatch"

    # Case 3: bf16 operand + bf16 activation-DMA path, f32 accumulation/epilogue.
    y3 = jax.block_until_ready(
        basic_block_forward(x1, p1, stride=2, compute_dtype=jnp.bfloat16))
    assert y3.shape == (2, 8, 8), y3.shape
    assert jnp.allclose(y3, r1, atol=1e-1, rtol=1e-1), "bf16 block mismatch"

    print("KERNEL_OK")
</pallas_src>

<mosaic_0001>
module attributes {stable_mosaic.version = 11 : i64} {
  func.func @kernel(%arg0: i32, %arg1: memref<2x16x4xf32, #tpu.memory_space<vmem>>, %arg2: memref<3x4x8xf32, #tpu.memory_space<vmem>>, %arg3: memref<3x8x8xf32, #tpu.memory_space<vmem>>, %arg4: memref<4x8xf32, #tpu.memory_space<vmem>>, %arg5: memref<3x8xf32, #tpu.memory_space<vmem>>, %arg6: memref<16x8xf32, #tpu.memory_space<vmem>>, %arg7: memref<2x18x4xf32, #tpu.memory_space<vmem>>, %arg8: memref<2x10x8xf32, #tpu.memory_space<vmem>>) attributes {dimension_semantics = [#tpu.dimension_semantics<parallel>], iteration_bounds = array<i64: 1>, scalar_prefetch = 0 : i64, scratch_operands = 2 : i64, tpu.core_type = #tpu.core_type<tc>, window_params = [{transform_indices = @transform_0, window_bounds = array<i64: 2, 16, 4>}, {pipeline_mode = #tpu.pipeline_mode<synchronous>, transform_indices = @transform_1, window_bounds = array<i64: 3, 4, 8>}, {pipeline_mode = #tpu.pipeline_mode<synchronous>, transform_indices = @transform_2, window_bounds = array<i64: 3, 8, 8>}, {pipeline_mode = #tpu.pipeline_mode<synchronous>, transform_indices = @transform_3, window_bounds = array<i64: 4, 8>}, {pipeline_mode = #tpu.pipeline_mode<synchronous>, transform_indices = @transform_4, window_bounds = array<i64: 3, 8>}, {transform_indices = @transform_5, window_bounds = array<i64: 16, 8>}]} {
    %cst = arith.constant 0.000000e+00 : f32
    %0 = vector.broadcast %cst : f32 to vector<2x1x4xf32>
    %c0 = arith.constant 0 : index
    %c0_0 = arith.constant 0 : index
    %c0_1 = arith.constant 0 : index
    %1 = vector.load %arg7[%c0, %c0_0, %c0_1] : memref<2x18x4xf32, #tpu.memory_space<vmem>>, vector<2x1x4xf32>
    tpu.vector_store %arg7[%c0, %c0_0, %c0_1], %0 {strides = array<i32>} : memref<2x18x4xf32, #tpu.memory_space<vmem>>, vector<2x1x4xf32>,
    %cst_2 = arith.constant 0.000000e+00 : f32
    %2 = vector.broadcast %cst_2 : f32 to vector<2x1x4xf32>
    %c0_3 = arith.constant 0 : index
    %c17 = arith.constant 17 : index
    %c0_4 = arith.constant 0 : index
    %3 = vector.load %arg7[%c0_3, %c17, %c0_4] : memref<2x18x4xf32, #tpu.memory_space<vmem>>, vector<2x1x4xf32>
    tpu.vector_store %arg7[%c0_3, %c17, %c0_4], %2 {strides = array<i32>} : memref<2x18x4xf32, #tpu.memory_space<vmem>>, vector<2x1x4xf32>,
    %c0_5 = arith.constant 0 : index
    %c0_6 = arith.constant 0 : index
    %c0_7 = arith.constant 0 : index
    %4 = vector.load %arg1[%c0_5, %c0_6, %c0_7] : memref<2x16x4xf32, #tpu.memory_space<vmem>>, vector<2x16x4xf32>
    %c0_8 = arith.constant 0 : index
    %c1 = arith.constant 1 : index
    %c0_9 = arith.constant 0 : index
    %5 = vector.load %arg7[%c0_8, %c1, %c0_9] : memref<2x18x4xf32, #tpu.memory_space<vmem>>, vector<2x16x4xf32>
    tpu.vector_store %arg7[%c0_8, %c1, %c0_9], %4 {strides = array<i32>} : memref<2x18x4xf32, #tpu.memory_space<vmem>>, vector<2x16x4xf32>,
    %c0_10 = arith.constant 0 : index
    %c0_11 = arith.constant 0 : index
    %c0_12 = arith.constant 0 : index
    %6 = tpu.strided_load %arg7[%c0_10, %c0_11, %c0_12] {strides = array<i32: 1, 2, 1>} : memref<2x18x4xf32, #tpu.memory_space<vmem>>, vector<2x8x4xf32>
    %7 = vector.shape_cast %6 : vector<2x8x4xf32> to vector<16x4xf32>
    %c0_13 = arith.constant 0 : index
    %c0_14 = arith.constant 0 : index
    %c0_15 = arith.constant 0 : index
    %8 = vector.load %arg2[%c0_13, %c0_14, %c0_15] : memref<3x4x8xf32, #tpu.memory_space<vmem>>, vector<1x4x8xf32>
    %9 = vector.shape_cast %8 : vector<1x4x8xf32> to vector<4x8xf32>
    %cst_16 = arith.constant dense<0.000000e+00> : vector<16x8xf32>
    %10 = tpu.matmul %7, %9, %cst_16 {dimension_numbers = #tpu.dot_dimension_numbers<[1], [0], [0], [1], [0, 0, 1, 1], [], []>} : vector<16x4xf32>, vector<4x8xf32>, vector<16x8xf32> -> vector<16x8xf32>
    %c0_17 = arith.constant 0 : index
    %c1_18 = arith.constant 1 : index
    %c0_19 = arith.constant 0 : index
    %11 = tpu.strided_load %arg7[%c0_17, %c1_18, %c0_19] {strides = array<i32: 1, 2, 1>} : memref<2x18x4xf32, #tpu.memory_space<vmem>>, vector<2x8x4xf32>
    %12 = vector.shape_cast %11 : vector<2x8x4xf32> to vector<16x4xf32>
    %c1_20 = arith.constant 1 : index
    %c0_21 = arith.constant 0 : index
    %c0_22 = arith.constant 0 : index
    %13 = vector.load %arg2[%c1_20, %c0_21, %c0_22] : memref<3x4x8xf32, #tpu.memory_space<vmem>>, vector<1x4x8xf32>
    %14 = vector.shape_cast %13 : vector<1x4x8xf32> to vector<4x8xf32>
    %cst_23 = arith.constant dense<0.000000e+00> : vector<16x8xf32>
    %15 = tpu.matmul %12, %14, %cst_23 {dimension_numbers = #tpu.dot_dimension_numbers<[1], [0], [0], [1], [0, 0, 1, 1], [], []>} : vector<16x4xf32>, vector<4x8xf32>, vector<16x8xf32> -> vector<16x8xf32>
    %16 = arith.addf %10, %15 : vector<16x8xf32>
    %c0_24 = arith.constant 0 : index
    %c2 = arith.constant 2 : index
    %c0_25 = arith.constant 0 : index
    %17 = tpu.strided_load %arg7[%c0_24, %c2, %c0_25] {strides = array<i32: 1, 2, 1>} : memref<2x18x4xf32, #tpu.memory_space<vmem>>, vector<2x8x4xf32>
    %18 = vector.shape_cast %17 : vector<2x8x4xf32> to vector<16x4xf32>
    %c2_26 = arith.constant 2 : index
    %c0_27 = arith.constant 0 : index
    %c0_28 = arith.constant 0 : index
    %19 = vector.load %arg2[%c2_26, %c0_27, %c0_28] : memref<3x4x8xf32, #tpu.memory_space<vmem>>, vector<1x4x8xf32>
    %20 = vector.shape_cast %19 : vector<1x4x8xf32> to vector<4x8xf32>
    %cst_29 = arith.constant dense<0.000000e+00> : vector<16x8xf32>
    %21 = tpu.matmul %18, %20, %cst_29 {dimension_numbers = #tpu.dot_dimension_numbers<[1], [0], [0], [1], [0, 0, 1, 1], [], []>} : vector<16x4xf32>, vector<4x8xf32>, vector<16x8xf32> -> vector<16x8xf32>
    %22 = arith.addf %16, %21 : vector<16x8xf32>
    %c0_30 = arith.constant 0 : index
    %c0_31 = arith.constant 0 : index
    %23 = vector.load %arg5[%c0_30, %c0_31] : memref<3x8xf32, #tpu.memory_space<vmem>>, vector<1x8xf32>
    %24 = vector.broadcast %23 : vector<1x8xf32> to vector<16x8xf32>
    %25 = arith.addf %22, %24 : vector<16x8xf32>
    %cst_32 = arith.constant 0.000000e+00 : f32
    %26 = vector.broadcast %cst_32 : f32 to vector<16x8xf32>
    %27 = arith.maximumf %25, %26 : vector<16x8xf32>
    %cst_33 = arith.constant 0.000000e+00 : f32
    %28 = vector.broadcast %cst_33 : f32 to vector<2x1x8xf32>
    %c0_34 = arith.constant 0 : index
    %c0_35 = arith.constant 0 : index
    %c0_36 = arith.constant 0 : index
    %29 = vector.load %arg8[%c0_34, %c0_35, %c0_36] : memref<2x10x8xf32, #tpu.memory_space<vmem>>, vector<2x1x8xf32>
    tpu.vector_store %arg8[%c0_34, %c0_35, %c0_36], %28 {strides = array<i32>} : memref<2x10x8xf32, #tpu.memory_space<vmem>>, vector<2x1x8xf32>,
    %cst_37 = arith.constant 0.000000e+00 : f32
    %30 = vector.broadcast %cst_37 : f32 to vector<2x1x8xf32>
    %c0_38 = arith.constant 0 : index
    %c9 = arith.constant 9 : index
    %c0_39 = arith.constant 0 : index
    %31 = vector.load %arg8[%c0_38, %c9, %c0_39] : memref<2x10x8xf32, #tpu.memory_space<vmem>>, vector<2x1x8xf32>
    tpu.vector_store %arg8[%c0_38, %c9, %c0_39], %30 {strides = array<i32>} : memref<2x10x8xf32, #tpu.memory_space<vmem>>, vector<2x1x8xf32>,
    %32 = vector.shape_cast %27 : vector<16x8xf32> to vector<2x8x8xf32>
    %c0_40 = arith.constant 0 : index
    %c1_41 = arith.constant 1 : index
    %c0_42 = arith.constant 0 : index
    %33 = vector.load %arg8[%c0_40, %c1_41, %c0_42] : memref<2x10x8xf32, #tpu.memory_space<vmem>>, vector<2x8x8xf32>
    tpu.vector_store %arg8[%c0_40, %c1_41, %c0_42], %32 {strides = array<i32>} : memref<2x10x8xf32, #tpu.memory_space<vmem>>, vector<2x8x8xf32>,
    %c0_43 = arith.constant 0 : index
    %c0_44 = arith.constant 0 : index
    %c0_45 = arith.constant 0 : index
    %34 = vector.load %arg8[%c0_43, %c0_44, %c0_45] : memref<2x10x8xf32, #tpu.memory_space<vmem>>, vector<2x8x8xf32>
    %35 = vector.shape_cast %34 : vector<2x8x8xf32> to vector<16x8xf32>
    %c0_46 = arith.constant 0 : index
    %c0_47 = arith.constant 0 : index
    %c0_48 = arith.constant 0 : index
    %36 = vector.load %arg3[%c0_46, %c0_47, %c0_48] : memref<3x8x8xf32, #tpu.memory_space<vmem>>, vector<1x8x8xf32>
    %37 = vector.shape_cast %36 : vector<1x8x8xf32> to vector<8x8xf32>
    %cst_49 = arith.constant dense<0.000000e+00> : vector<16x8xf32>
    %38 = tpu.matmul %35, %37, %cst_49 {dimension_numbers = #tpu.dot_dimension_numbers<[1], [0], [0], [1], [0, 0, 1, 1], [], []>} : vector<16x8xf32>, vector<8x8xf32>, vector<16x8xf32> -> vector<16x8xf32>
    %c0_50 = arith.constant 0 : index
    %c1_51 = arith.constant 1 : index
    %c0_52 = arith.constant 0 : index
    %39 = vector.load %arg8[%c0_50, %c1_51, %c0_52] : memref<2x10x8xf32, #tpu.memory_space<vmem>>, vector<2x8x8xf32>
    %40 = vector.shape_cast %39 : vector<2x8x8xf32> to vector<16x8xf32>
    %c1_53 = arith.constant 1 : index
    %c0_54 = arith.constant 0 : index
    %c0_55 = arith.constant 0 : index
    %41 = vector.load %arg3[%c1_53, %c0_54, %c0_55] : memref<3x8x8xf32, #tpu.memory_space<vmem>>, vector<1x8x8xf32>
    %42 = vector.shape_cast %41 : vector<1x8x8xf32> to vector<8x8xf32>
    %cst_56 = arith.constant dense<0.000000e+00> : vector<16x8xf32>
    %43 = tpu.matmul %40, %42, %cst_56 {dimension_numbers = #tpu.dot_dimension_numbers<[1], [0], [0], [1], [0, 0, 1, 1], [], []>} : vector<16x8xf32>, vector<8x8xf32>, vector<16x8xf32> -> vector<16x8xf32>
    %44 = arith.addf %38, %43 : vector<16x8xf32>
    %c0_57 = arith.constant 0 : index
    %c2_58 = arith.constant 2 : index
    %c0_59 = arith.constant 0 : index
    %45 = vector.load %arg8[%c0_57, %c2_58, %c0_59] : memref<2x10x8xf32, #tpu.memory_space<vmem>>, vector<2x8x8xf32>
    %46 = vector.shape_cast %45 : vector<2x8x8xf32> to vector<16x8xf32>
    %c2_60 = arith.constant 2 : index
    %c0_61 = arith.constant 0 : index
    %c0_62 = arith.constant 0 : index
    %47 = vector.load %arg3[%c2_60, %c0_61, %c0_62] : memref<3x8x8xf32, #tpu.memory_space<vmem>>, vector<1x8x8xf32>
    %48 = vector.shape_cast %47 : vector<1x8x8xf32> to vector<8x8xf32>
    %cst_63 = arith.constant dense<0.000000e+00> : vector<16x8xf32>
    %49 = tpu.matmul %46, %48, %cst_63 {dimension_numbers = #tpu.dot_dimension_numbers<[1], [0], [0], [1], [0, 0, 1, 1], [], []>} : vector<16x8xf32>, vector<8x8xf32>, vector<16x8xf32> -> vector<16x8xf32>
    %50 = arith.addf %44, %49 : vector<16x8xf32>
    %c1_64 = arith.constant 1 : index
    %c0_65 = arith.constant 0 : index
    %51 = vector.load %arg5[%c1_64, %c0_65] : memref<3x8xf32, #tpu.memory_space<vmem>>, vector<1x8xf32>
    %52 = vector.broadcast %51 : vector<1x8xf32> to vector<16x8xf32>
    %53 = arith.addf %50, %52 : vector<16x8xf32>
    %c0_66 = arith.constant 0 : index
    %c1_67 = arith.constant 1 : index
    %c0_68 = arith.constant 0 : index
    %54 = tpu.strided_load %arg7[%c0_66, %c1_67, %c0_68] {strides = array<i32: 1, 2, 1>} : memref<2x18x4xf32, #tpu.memory_space<vmem>>, vector<2x8x4xf32>
    %55 = vector.shape_cast %54 : vector<2x8x4xf32> to vector<16x4xf32>
    %c0_69 = arith.constant 0 : index
    %c0_70 = arith.constant 0 : index
    %56 = vector.load %arg4[%c0_69, %c0_70] : memref<4x8xf32, #tpu.memory_space<vmem>>, vector<4x8xf32>
    %cst_71 = arith.constant dense<0.000000e+00> : vector<16x8xf32>
    %57 = tpu.matmul %55, %56, %cst_71 {dimension_numbers = #tpu.dot_dimension_numbers<[1], [0], [0], [1], [0, 0, 1, 1], [], []>} : vector<16x4xf32>, vector<4x8xf32>, vector<16x8xf32> -> vector<16x8xf32>
    %c2_72 = arith.constant 2 : index
    %c0_73 = arith.constant 0 : index
    %58 = vector.load %arg5[%c2_72, %c0_73] : memref<3x8xf32, #tpu.memory_space<vmem>>, vector<1x8xf32>
    %59 = vector.broadcast %58 : vector<1x8xf32> to vector<16x8xf32>
    %60 = arith.addf %57, %59 : vector<16x8xf32>
    %61 = arith.addf %53, %60 : vector<16x8xf32>
    %cst_74 = arith.constant 0.000000e+00 : f32
    %62 = vector.broadcast %cst_74 : f32 to vector<16x8xf32>
    %63 = arith.maximumf %61, %62 : vector<16x8xf32>
    %c0_75 = arith.constant 0 : index
    %c0_76 = arith.constant 0 : index
    %64 = vector.load %arg6[%c0_75, %c0_76] : memref<16x8xf32, #tpu.memory_space<vmem>>, vector<16x8xf32>
    tpu.vector_store %arg6[%c0_75, %c0_76], %63 {strides = array<i32>} : memref<16x8xf32, #tpu.memory_space<vmem>>, vector<16x8xf32>,
    return
  }
  func.func @transform_0(%arg0: i32) -> (i32, i32, i32) {
    %c0_i32 = arith.constant 0 : i32
    %c0_i32_0 = arith.constant 0 : i32
    %c0_i32_1 = arith.constant 0 : i32
    return %arg0, %c0_i32, %c0_i32_0 : i32, i32, i32
  }
  func.func @transform_1(%arg0: i32) -> (i32, i32, i32) {
    %c0_i32 = arith.constant 0 : i32
    %c0_i32_0 = arith.constant 0 : i32
    %c0_i32_1 = arith.constant 0 : i32
    %c0_i32_2 = arith.constant 0 : i32
    return %c0_i32, %c0_i32_0, %c0_i32_1 : i32, i32, i32
  }
  func.func @transform_2(%arg0: i32) -> (i32, i32, i32) {
    %c0_i32 = arith.constant 0 : i32
    %c0_i32_0 = arith.constant 0 : i32
    %c0_i32_1 = arith.constant 0 : i32
    %c0_i32_2 = arith.constant 0 : i32
    return %c0_i32, %c0_i32_0, %c0_i32_1 : i32, i32, i32
  }
  func.func @transform_3(%arg0: i32) -> (i32, i32) {
    %c0_i32 = arith.constant 0 : i32
    %c0_i32_0 = arith.constant 0 : i32
    %c0_i32_1 = arith.constant 0 : i32
    return %c0_i32, %c0_i32_0 : i32, i32
  }
  func.func @transform_4(%arg0: i32) -> (i32, i32) {
    %c0_i32 = arith.constant 0 : i32
    %c0_i32_0 = arith.constant 0 : i32
    %c0_i32_1 = arith.constant 0 : i32
    return %c0_i32, %c0_i32_0 : i32, i32
  }
  func.func @transform_5(%arg0: i32) -> (i32, i32) {
    %c0_i32 = arith.constant 0 : i32
    %c0_i32_0 = arith.constant 0 : i32
    return %arg0, %c0_i32 : i32, i32
  }
}

</mosaic_0001>

<llo_original>
// kernel: tpu_custom_call.1
$region0: #{tpu_custom_call.1}
  #allocation0 [shape = 'u32[]', space=smem, size = 0x4, offset = 0x4, fixed_abs, tag = 'smem constant byte address 0x4 - core index']
  #allocation1 [shape = 'u32[72,128]{1,0:T(1,128)}', space=vmem, size = 0x9000, scoped, tag = 'internal scratch']
  #allocation2 [shape = 'f32[2,18,4]{2,1,0:T(8,128)}', space=vmem, size = 0x6000, scoped, tag = 'scratch operand']
  #allocation3 [shape = 'f32[2,10,8]{2,1,0:T(8,128)}', space=vmem, size = 0x4000, scoped, tag = 'scratch operand']
  %s0 = inlined_call_operand.vmem [shape: f32[2,16,4], index: 0, kind: input, shape index: {}]
  %s1 = inlined_call_operand.vmem [shape: f32[3,4,8], index: 1, kind: input, shape index: {}]
  %s2 = inlined_call_operand.vmem [shape: f32[3,8,8], index: 2, kind: input, shape index: {}]
  %s3 = inlined_call_operand.vmem [shape: f32[4,8], index: 3, kind: input, shape index: {}]
  %s4 = inlined_call_operand.hbm [shape: f32[3,8], index: 4, kind: input, shape index: {}]
  %s5 = inlined_call_operand.vmem [shape: f32[16,8], index: 5, kind: output, shape index: {}]
  %s6 = sld [smem:[#allocation0]]
  $region34: #{tpu_custom_call.1} parent=0
    _
  %s8 = ssub.s32 1, %s6
  %s9 = scalar_select 0, %s8, %s6
  $region1: #{tpu_custom_call.1} parent=0
    #allocation4 [shape = 'u8[2048]{0}', space=vmem, size = 0x800, scoped, tag = 'input window, operand 4, single buffered']
    #allocation5 [shape = 's32[1]{0}', space=sflag, size = 0x4, scoped, tag = 'scoped memory for tpu_custom_call.1']
    %10 = vsyncpa [#allocation5], 0
    // Predicated region
    $region2: #{tpu_custom_call.1} parent=1 // pred_check
      _
    $region3: #{tpu_custom_call.1} parent=1 // pred_check_branch
      %12 = sbr.rel (0) target = $region5
    $region4: #{tpu_custom_call.1} parent=1 // pred_region
      _
    $region5: #{tpu_custom_call.1} parent=1 // pred_fallthru
      _
    // Predicated region
    $region6: #{tpu_custom_call.1} parent=1 // pred_check
      _
    $region7: #{tpu_custom_call.1} parent=1 // pred_check_branch
      %14 = sbr.rel (0) target = $region9
    $region8: #{tpu_custom_call.1} parent=1 // pred_region
      _
    $region9: #{tpu_custom_call.1} parent=1 // pred_fallthru
      _
    // Predicated region
    $region10: #{tpu_custom_call.1} parent=1 // pred_check
      _
    $region11: #{tpu_custom_call.1} parent=1 // pred_check_branch
      %16 = sbr.rel (0) target = $region13
    $region12: #{tpu_custom_call.1} parent=1 // pred_region
      _
    $region13: #{tpu_custom_call.1} parent=1 // pred_fallthru
      _
    // Predicated region
    $region14: #{tpu_custom_call.1} parent=1 // pred_check
      _
    $region15: #{tpu_custom_call.1} parent=1 // pred_check_branch
      %18 = sbr.rel (0) target = $region17
    $region16: #{tpu_custom_call.1} parent=1 // pred_region
      _
    $region17: #{tpu_custom_call.1} parent=1 // pred_fallthru
      _
    // Predicated region
    $region18: #{tpu_custom_call.1} parent=1 // pred_check
      _
    $region19: #{tpu_custom_call.1} parent=1 // pred_check_branch
      %20 = sbr.rel (0) target = $region21
    $region20: #{tpu_custom_call.1} parent=1 // pred_region
      %22 = vsyncadd [#allocation5], 0
      %s24 = sshll.u32 %s4, 4
      %s25 = int_to_ptr.hbm [resolvable:$true] %s24
      %s26 = sshll.u32 [#allocation4], 4
      %s27 = int_to_ptr.vmem [resolvable:$true] %s26
      %29 = dma.hbm_to_vmem [thread:$0]  %s25, 64, %s27, [#allocation5]
    $region21: #{tpu_custom_call.1} parent=1 // pred_fallthru
      _
    // Predicated region
    $region22: #{tpu_custom_call.1} parent=1 // pred_check
      _
    $region23: #{tpu_custom_call.1} parent=1 // pred_check_branch
      %31 = sbr.rel (0) target = $region25
    $region24: #{tpu_custom_call.1} parent=1 // pred_region
      %33 = dma.done [#allocation5], 64
    $region25: #{tpu_custom_call.1} parent=1 // pred_fallthru
      _
    %vm34 = vcmask 24576
    %35 = vst.msk [vmem:[#allocation2] sm:$0x1] %vm34, 0.0
    %36 = vst.msk [vmem:[#allocation2 + $0x18] sm:$0x1] %vm34, 0.0
    %37 = vst.msk [vmem:[#allocation2 + $0x11] sm:$0x1] %vm34, 0.0
    %38 = vst.msk [vmem:[#allocation2 + $0x29] sm:$0x1] %vm34, 0.0
    %v39 = vld [vmem:[%s0] sm:$0xff]
    %v40 = vld [vmem:[%s0 + $0x8] sm:$0xff]
    %v41 = vld [vmem:[%s0 + $0x10] sm:$0xff]
    %v42 = vld [vmem:[%s0 + $0x18] sm:$0xff]
    %vm43 = vcmask 31744
    %44 = vst.msk [vmem:[#allocation2 + $0x1] sm:$0xff] %vm43, %v39
    %45 = vst.msk [vmem:[#allocation2 + $0x9] sm:$0xff] %vm43, %v40
    %46 = vst.msk [vmem:[#allocation2 + $0x19] sm:$0xff] %vm43, %v41
    %47 = vst.msk [vmem:[#allocation2 + $0x21] sm:$0xff] %vm43, %v42
    %v48 = vld [vmem:[#allocation2] ss:$2 sm:$0xff]
    %s49 = scalar_lea.vmem [#allocation2], 24
    %v50 = vld [vmem:[%s49] ss:$2 sm:$0xff]
    %v51 = vld [vmem:[%s1] sm:$0xf]
    %s52 = scalar_lea.vmem [#allocation2], 1
    %v53 = vld [vmem:[%s52] ss:$2 sm:$0xff]
    %s54 = scalar_lea.vmem [#allocation2], 25
    %v55 = vld [vmem:[%s54] ss:$2 sm:$0xff]
    %s56 = scalar_lea.vmem %s1, 4
    %v57 = vld [vmem:[%s56] sm:$0xf]
    %v59 = vsel %vm43, %v53, 0
    %v62 = vsel %vm43, %v55, 0
    %vm64 = vcmask 1043456
    %v66 = vsel %vm64, %v57, 0
    %68 = vmatpush.msra.mxu0 0.0
    %69 = vmatpush.msra.mxu0 0.0
    %70 = vmatpush.msra.mxu0 0.0
    %71 = vmatpush.msra.mxu0 0.0
    %72 = vmatpush.msra.mxu0 0.0
    %73 = vmatpush.msra.mxu0 0.0
    %74 = vmatpush.msra.mxu0 0.0
    %75 = vmatpush.msra.mxu0 0.0
    %76 = vmatpush.msra.mxu0 0.0
    %77 = vmatpush.msra.mxu0 0.0
    %78 = vmatpush.msra.mxu0 0.0
    %79 = vmatpush.msra.mxu0 0.0
    %80 = vmatpush.msra.mxu0 0.0
    %81 = vmatpush.msra.mxu0 0.0
    %82 = vmatpush.msra.mxu0 0.0
    %83 = vmatpush.msra.mxu0 %v66
    %84 = vmatmul.f32.gmra.mxu0 %v59
    %v85 = vpop.f32.mrf.mxu0
    %v86 = vadd.f32 0.0, %v85
    %87 = vmatmul.f32.gmra.mxu0 %v62
    %v88 = vpop.f32.mrf.mxu0
    %v89 = vadd.f32 0.0, %v88
    %90 = vdwg.mxu0
    %v92 = vsel %vm43, %v48, 0
    %v95 = vsel %vm43, %v50, 0
    %v98 = vsel %vm64, %v51, 0
    %100 = vmatpush.msra.mxu0 0.0
    %101 = vmatpush.msra.mxu0 0.0
    %102 = vmatpush.msra.mxu0 0.0
    %103 = vmatpush.msra.mxu0 0.0
    %104 = vmatpush.msra.mxu0 0.0
    %105 = vmatpush.msra.mxu0 0.0
    %106 = vmatpush.msra.mxu0 0.0
    %107 = vmatpush.msra.mxu0 0.0
    %108 = vmatpush.msra.mxu0 0.0
    %109 = vmatpush.msra.mxu0 0.0
    %110 = vmatpush.msra.mxu0 0.0
    %111 = vmatpush.msra.mxu0 0.0
    %112 = vmatpush.msra.mxu0 0.0
    %113 = vmatpush.msra.mxu0 0.0
    %114 = vmatpush.msra.mxu0 0.0
    %115 = vmatpush.msra.mxu0 %v98
    %116 = vmatmul.f32.gmra.mxu0 %v92
    %v117 = vpop.f32.mrf.mxu0
    %v118 = vadd.f32 %v86, %v117
    %119 = vmatmul.f32.gmra.mxu0 %v95
    %v120 = vpop.f32.mrf.mxu0
    %v121 = vadd.f32 %v89, %v120
    %122 = vdwg.mxu0
    %s123 = scalar_lea.vmem [#allocation2], 2
    %v124 = vld [vmem:[%s123] ss:$2 sm:$0xff]
    %s125 = scalar_lea.vmem [#allocation2], 26
    %v126 = vld [vmem:[%s125] ss:$2 sm:$0xff]
    %s127 = scalar_lea.vmem %s1, 8
    %v128 = vld [vmem:[%s127] sm:$0xf]
    %v130 = vsel %vm43, %v124, 0
    %v133 = vsel %vm43, %v126, 0
    %v136 = vsel %vm64, %v128, 0
    %138 = vmatpush.msra.mxu0 0.0
    %139 = vmatpush.msra.mxu0 0.0
    %140 = vmatpush.msra.mxu0 0.0
    %141 = vmatpush.msra.mxu0 0.0
    %142 = vmatpush.msra.mxu0 0.0
    %143 = vmatpush.msra.mxu0 0.0
    %144 = vmatpush.msra.mxu0 0.0
    %145 = vmatpush.msra.mxu0 0.0
    %146 = vmatpush.msra.mxu0 0.0
    %147 = vmatpush.msra.mxu0 0.0
    %148 = vmatpush.msra.mxu0 0.0
    %149 = vmatpush.msra.mxu0 0.0
    %150 = vmatpush.msra.mxu0 0.0
    %151 = vmatpush.msra.mxu0 0.0
    %152 = vmatpush.msra.mxu0 0.0
    %153 = vmatpush.msra.mxu0 %v136
    %154 = vmatmul.f32.gmra.mxu0 %v130
    %v155 = vpop.f32.mrf.mxu0
    %v156 = vadd.f32 0.0, %v155
    %157 = vmatmul.f32.gmra.mxu0 %v133
    %v158 = vpop.f32.mrf.mxu0
    %v159 = vadd.f32 0.0, %v158
    %160 = vdwg.mxu0
    %v161 = vadd.f32 %v118, %v156
    %v162 = vadd.f32 %v121, %v159
    %v163 = vld [vmem:[#allocation4] sm:$0x1]
    %v164 = vperm.slane %v163, 0
    %v165 = vadd.f32 %v161, %v164
    %v166 = vadd.f32 %v162, %v164
    %v167 = vmax.f32 %v165, 0.0
    %v168 = vmax.f32 %v166, 0.0
    %vm169 = vcmask 57344
    %170 = vst.msk [vmem:[#allocation3] sm:$0x1] %vm169, 0.0
    %171 = vst.msk [vmem:[#allocation3 + $0x10] sm:$0x1] %vm169, 0.0
    %172 = vst.msk [vmem:[#allocation3 + $0x9] sm:$0x1] %vm169, 0.0
    %173 = vst.msk [vmem:[#allocation3 + $0x19] sm:$0x1] %vm169, 0.0
    %vm174 = vcmask 64512
    %175 = vst.msk [vmem:[#allocation3 + $0x1] sm:$0xff] %vm174, %v167
    %176 = vst.msk [vmem:[#allocation3 + $0x11] sm:$0xff] %vm174, %v168
    %v177 = vld [vmem:[#allocation3] sm:$0xff]
    %v178 = vld [vmem:[#allocation3 + $0x10] sm:$0xff]
    %v179 = vld [vmem:[%s2] sm:$0xff]
    %v180 = vld [vmem:[#allocation3 + $0x1] sm:$0xff]
    %v181 = vld [vmem:[#allocation3 + $0x11] sm:$0xff]
    %s182 = scalar_lea.vmem %s2, 8
    %v183 = vld [vmem:[%s182] sm:$0xff]
    %v185 = vsel %vm174, %v180, 0
    %v188 = vsel %vm174, %v181, 0
    %190 = vmatpush.msra.mxu0 0.0
    %191 = vmatpush.msra.mxu0 0.0
    %192 = vmatpush.msra.mxu0 0.0
    %193 = vmatpush.msra.mxu0 0.0
    %194 = vmatpush.msra.mxu0 0.0
    %195 = vmatpush.msra.mxu0 0.0
    %196 = vmatpush.msra.mxu0 0.0
    %197 = vmatpush.msra.mxu0 0.0
    %198 = vmatpush.msra.mxu0 0.0
    %199 = vmatpush.msra.mxu0 0.0
    %200 = vmatpush.msra.mxu0 0.0
    %201 = vmatpush.msra.mxu0 0.0
    %202 = vmatpush.msra.mxu0 0.0
    %203 = vmatpush.msra.mxu0 0.0
    %204 = vmatpush.msra.mxu0 0.0
    %205 = vmatpush.msra.mxu0 %v183
    %206 = vmatmul.f32.gmra.mxu0 %v185
    %v207 = vpop.f32.mrf.mxu0
    %v208 = vadd.f32 0.0, %v207
    %209 = vmatmul.f32.gmra.mxu0 %v188
    %v210 = vpop.f32.mrf.mxu0
    %v211 = vadd.f32 0.0, %v210
    %212 = vdwg.mxu0
    %v214 = vsel %vm174, %v177, 0
    %v217 = vsel %vm174, %v178, 0
    %219 = vmatpush.msra.mxu0 0.0
    %220 = vmatpush.msra.mxu0 0.0
    %221 = vmatpush.msra.mxu0 0.0
    %222 = vmatpush.msra.mxu0 0.0
    %223 = vmatpush.msra.mxu0 0.0
    %224 = vmatpush.msra.mxu0 0.0
    %225 = vmatpush.msra.mxu0 0.0
    %226 = vmatpush.msra.mxu0 0.0
    %227 = vmatpush.msra.mxu0 0.0
    %228 = vmatpush.msra.mxu0 0.0
    %229 = vmatpush.msra.mxu0 0.0
    %230 = vmatpush.msra.mxu0 0.0
    %231 = vmatpush.msra.mxu0 0.0
    %232 = vmatpush.msra.mxu0 0.0
    %233 = vmatpush.msra.mxu0 0.0
    %234 = vmatpush.msra.mxu0 %v179
    %235 = vmatmul.f32.gmra.mxu0 %v214
    %v236 = vpop.f32.mrf.mxu0
    %v237 = vadd.f32 %v208, %v236
    %238 = vmatmul.f32.gmra.mxu0 %v217
    %v239 = vpop.f32.mrf.mxu0
    %v240 = vadd.f32 %v211, %v239
    %241 = vdwg.mxu0
    %v242 = vld [vmem:[#allocation3 + $0x2] sm:$0xff]
    %v243 = vld [vmem:[#allocation3 + $0x12] sm:$0xff]
    %s244 = scalar_lea.vmem %s2, 16
    %v245 = vld [vmem:[%s244] sm:$0xff]
    %v247 = vsel %vm174, %v242, 0
    %v250 = vsel %vm174, %v243, 0
    %252 = vmatpush.msra.mxu0 0.0
    %253 = vmatpush.msra.mxu0 0.0
    %254 = vmatpush.msra.mxu0 0.0
    %255 = vmatpush.msra.mxu0 0.0
    %256 = vmatpush.msra.mxu0 0.0
    %257 = vmatpush.msra.mxu0 0.0
    %258 = vmatpush.msra.mxu0 0.0
    %259 = vmatpush.msra.mxu0 0.0
    %260 = vmatpush.msra.mxu0 0.0
    %261 = vmatpush.msra.mxu0 0.0
    %262 = vmatpush.msra.mxu0 0.0
    %263 = vmatpush.msra.mxu0 0.0
    %264 = vmatpush.msra.mxu0 0.0
    %265 = vmatpush.msra.mxu0 0.0
    %266 = vmatpush.msra.mxu0 0.0
    %267 = vmatpush.msra.mxu0 %v245
    %268 = vmatmul.f32.gmra.mxu0 %v247
    %v269 = vpop.f32.mrf.mxu0
    %v270 = vadd.f32 0.0, %v269
    %271 = vmatmul.f32.gmra.mxu0 %v250
    %v272 = vpop.f32.mrf.mxu0
    %v273 = vadd.f32 0.0, %v272
    %274 = vdwg.mxu0
    %v275 = vadd.f32 %v237, %v270
    %v276 = vadd.f32 %v240, %v273
    %v277 = vld [vmem:[#allocation4 + $0x1] sm:$0x1]
    %v278 = vperm.slane %v277, 0
    %v279 = vadd.f32 %v275, %v278
    %v280 = vadd.f32 %v276, %v278
    %v281 = vld [vmem:[%s52] ss:$2 sm:$0xff]
    %v282 = vld [vmem:[%s54] ss:$2 sm:$0xff]
    %v283 = vld [vmem:[%s3] sm:$0xf]
    %v284 = vld [vmem:[#allocation4 + $0x2] sm:$0x1]
    %v285 = vperm.slane %v284, 0
    %v287 = vsel %vm43, %v281, 0
    %v290 = vsel %vm43, %v282, 0
    %v293 = vsel %vm64, %v283, 0
    %295 = vmatpush.msra.mxu0 0.0
    %296 = vmatpush.msra.mxu0 0.0
    %297 = vmatpush.msra.mxu0 0.0
    %298 = vmatpush.msra.mxu0 0.0
    %299 = vmatpush.msra.mxu0 0.0
    %300 = vmatpush.msra.mxu0 0.0
    %301 = vmatpush.msra.mxu0 0.0
    %302 = vmatpush.msra.mxu0 0.0
    %303 = vmatpush.msra.mxu0 0.0
    %304 = vmatpush.msra.mxu0 0.0
    %305 = vmatpush.msra.mxu0 0.0
    %306 = vmatpush.msra.mxu0 0.0
    %307 = vmatpush.msra.mxu0 0.0
    %308 = vmatpush.msra.mxu0 0.0
    %309 = vmatpush.msra.mxu0 0.0
    %310 = vmatpush.msra.mxu0 %v293
    %311 = vmatmul.f32.gmra.mxu0 %v287
    %v312 = vpop.f32.mrf.mxu0
    %v313 = vadd.f32 %v285, %v312
    %314 = vmatmul.f32.gmra.mxu0 %v290
    %v315 = vpop.f32.mrf.mxu0
    %v316 = vadd.f32 %v285, %v315
    %317 = vdwg.mxu0
    %v318 = vadd.f32 %v279, %v313
    %v319 = vadd.f32 %v280, %v316
    %v320 = vmax.f32 %v318, 0.0
    %v321 = vmax.f32 %v319, 0.0
    %322 = vst.msk [vmem:[%s5] sm:$0xff] %vm174, %v320
    %323 = vst.msk [vmem:[%s5 + $0x8] sm:$0xff] %vm174, %v321
    // Predicated region
    $region26: #{tpu_custom_call.1} parent=1 // pred_check
      _
    $region27: #{tpu_custom_call.1} parent=1 // pred_check_branch
      %325 = sbr.rel (0) target = $region29
    $region28: #{tpu_custom_call.1} parent=1 // pred_region
      _
    $region29: #{tpu_custom_call.1} parent=1 // pred_fallthru
      _
    // Predicated region
    $region30: #{tpu_custom_call.1} parent=1 // pred_check
      _
    $region31: #{tpu_custom_call.1} parent=1 // pred_check_branch
      %327 = sbr.rel (0) target = $region33
    $region32: #{tpu_custom_call.1} parent=1 // pred_region
      _
    $region33: #{tpu_custom_call.1} parent=1 // pred_fallthru
      _
    %328 = vsyncpa [#allocation5], 1

</llo_original>
